<compile_context>
chip_gen: v5e
topology: v5e:2x2
jax: 0.10.0
libtpu: 0.0.40
codegen_flags: <defaults>
</compile_context>

<pallas_src>
import functools

import jax
import jax.numpy as jnp
from jax.experimental import pallas as pl
from jax.experimental.pallas import tpu as pltpu

# Constants from the PyTorch module's __init__ (deterministic, no checkpoint):
#   self.alpha = torch.Tensor([1, 3]); self.gamma = 2; self.epsilon = 1e-09
ALPHA_NEG = 1.0   # alpha[0], used where target != 1
ALPHA_POS = 3.0   # alpha[1], used where target == 1
EPS = 1e-9

LANE = 128
SUBLANE = 8
CHUNK = SUBLANE * LANE            # 1024 elements per (8,128) slab
MAX_BLOCK_ROWS = 4096             # (4096,128) f32 = 2 MiB/input/buffer
NUM_SHARDS = 2                    # 2 TensorCores on v7x; harmless split on v5e/v6e


def _focal_kernel(prob_ref, tgt_ref, out_ref, *, block_rows, blocks_per_shard,
                  num_blocks, total_rows, need_row_mask, has_dup_blocks):
    """One row-block of focal loss, accumulated into a per-shard (8,128) slab."""
    c = pl.program_id(0)                 # shard (parallel axis)
    j = pl.program_id(1)                 # row-block within shard (reduction axis)
    blk = c * blocks_per_shard + j       # unclamped logical block index

    @pl.when(j == 0)
    def _init():
        out_ref[...] = jnp.zeros_like(out_ref)

    def _fold_acc(x):
        # Fold (block_rows, 128) -> (8, 128) with pure VPU adds; the single
        # cross-lane reduce + divide by N happens once in the wrapper.
        out_ref[...] += jnp.sum(
            x.reshape(block_rows // SUBLANE, SUBLANE, LANE), axis=0)

    def _body():
        prob = prob_ref[...].astype(jnp.float32)
        tgt = tgt_ref[...].astype(jnp.float32)

        is_pos = tgt == 1.0                        # torch.where(target == 1, ...)
        q = 1.0 - prob                             # computed once, reused twice
        pt = jnp.where(is_pos, prob, q)
        one_minus_pt = jnp.where(is_pos, q, prob)
        neg_alpha = jnp.where(is_pos, -ALPHA_POS, -ALPHA_NEG)  # folds the -1
        log_pt = jnp.log(pt + EPS)                 # EUP slot, hidden under DMA
        loss = neg_alpha * (one_minus_pt * one_minus_pt) * log_pt   # gamma = 2

        if need_row_mask:
            # Only the last logical block can contain rows past total_rows
            # (Pallas pads boundary blocks with unspecified data).  Keep the
            # select (not a multiply) so NaN/-inf from log of garbage rows
            # can never poison the accumulator.
            is_last = blk == num_blocks - 1

            @pl.when(is_last)
            def _tail():
                row_ids = blk * block_rows + jax.lax.broadcasted_iota(
                    jnp.int32, (block_rows, LANE), 0)
                _fold_acc(jnp.where(row_ids < total_rows, loss, 0.0))

            @pl.when(blk != num_blocks - 1)
            def _main():
                _fold_acc(loss)
        else:
            _fold_acc(loss)

    if has_dup_blocks:
        # Ragged shard: clamped duplicate blocks skip all VPU/EUP work and the
        # accumulate (DMA cannot be skipped under BlockSpec auto-pipelining).
        pl.when(blk < num_blocks)(_body)
    else:
        _body()


def _focal_partial_sum(p2, t2, *, num_shards):
    """Sum of per-element focal losses over a lane-dense (rows, 128) slab."""
    rows = p2.shape[0]                                   # multiple of 8
    block_rows = min(MAX_BLOCK_ROWS, rows)               # multiple of 8
    num_blocks = -(-rows // block_rows)
    ns = num_shards if num_blocks >= num_shards else 1
    bps = -(-num_blocks // ns)                            # blocks per shard
    has_dup = (bps * ns) != num_blocks                    # clamped duplicates?
    need_row_mask = (rows % block_rows) != 0              # partial last block?

    if has_dup:
        # Clamp so every DMA start stays in bounds; pl.when in-kernel skips
        # the duplicated blocks' compute/accumulate.
        def in_map(c, j):
            return (jnp.minimum(c * bps + j, num_blocks - 1), 0)
    else:
        def in_map(c, j):
            return (c * bps + j, 0)

    kernel = functools.partial(
        _focal_kernel,
        block_rows=block_rows,
        blocks_per_shard=bps,
        num_blocks=num_blocks,
        total_rows=rows,
        need_row_mask=need_row_mask,
        has_dup_blocks=has_dup,
    )

    partials = pl.pallas_call(
        kernel,
        out_shape=jax.ShapeDtypeStruct((ns * SUBLANE, LANE), jnp.float32),
        grid_spec=pltpu.PrefetchScalarGridSpec(
            num_scalar_prefetch=0,
            grid=(ns, bps),
            in_specs=[
                pl.BlockSpec((block_rows, LANE), in_map),
                pl.BlockSpec((block_rows, LANE), in_map),
            ],
            out_specs=pl.BlockSpec((SUBLANE, LANE), lambda c, j: (c, 0)),
        ),
        compiler_params=pltpu.CompilerParams(
            dimension_semantics=("parallel", "arbitrary")),
    )(p2, t2)

    # Single cross-lane reduction, once, outside the kernel.
    return jnp.sum(partials)


def _focal_sum_small(p, t):
    """Tiny jnp path for the <=1023-element unaligned remainder."""
    p = p.astype(jnp.float32)
    t = t.astype(jnp.float32)
    is_pos = t == 1.0
    q = 1.0 - p
    pt = jnp.where(is_pos, p, q)
    omp = jnp.where(is_pos, q, p)
    neg_alpha = jnp.where(is_pos, -ALPHA_POS, -ALPHA_NEG)
    return jnp.sum(neg_alpha * (omp * omp) * jnp.log(pt + EPS))


def binary_focal_loss(prob, target, *, num_shards=NUM_SHARDS):
    """Mean binary focal loss (alpha=[1,3], gamma=2, eps=1e-9).

    prob/target keep their caller dtype (f32/bf16/bool/int8, ...); the f32
    cast happens inside the kernel under DMA.  Pass num_shards=1 on
    single-TensorCore chips (v5e/v6e) if you want to avoid the 2-way split.
    """
    n = prob.size
    p = prob.reshape(-1)          # contiguous -> bitcast reshape, no HBM copy
    t = target.reshape(-1)

    n_main = (n // CHUNK) * CHUNK        # aligned prefix handled by the kernel
    total = jnp.zeros((), jnp.float32)

    if n_main:
        if n_main != n:
            # Uncommon unaligned case: slice off the aligned prefix.
            p_main = jax.lax.slice(p, (0,), (n_main,))
            t_main = jax.lax.slice(t, (0,), (n_main,))
        else:
            p_main, t_main = p, t         # common case: pure bitcast, zero copy
        rows = n_main // LANE             # multiple of 8
        total = total + _focal_partial_sum(
            p_main.reshape(rows, LANE), t_main.reshape(rows, LANE),
            num_shards=num_shards)

    if n_main != n:
        # <=1023-element remainder: trivial jnp expression, no padding pass.
        total = total + _focal_sum_small(
            jax.lax.slice(p, (n_main,), (n,)),
            jax.lax.slice(t, (n_main,), (n,)))

    return total * (1.0 / n)


def _reference(prob, target):
    prob = prob.astype(jnp.float32)
    target = target.astype(jnp.float32)
    is_pos = target == 1.0
    pt = jnp.where(is_pos, prob, 1.0 - prob)
    alpha = jnp.where(is_pos, ALPHA_POS, ALPHA_NEG)
    log_pt = jnp.log(pt + EPS)
    focal = (1.0 - pt) ** 2
    return jnp.mean(-1.0 * alpha * focal * log_pt)


if __name__ == "__main__":
    key = jax.random.PRNGKey(0)
    k_p, k_t, k_p2, k_t2 = jax.random.split(key, 4)

    # Small NCHW-like probability/label maps: [2, 4, 16, 16] (aligned case).
    shape = (2, 4, 16, 16)
    prob = jax.nn.sigmoid(jax.random.normal(k_p, shape, dtype=jnp.float32))
    target = jax.random.bernoulli(k_t, p=0.3, shape=shape).astype(jnp.float32)

    loss = jax.block_until_ready(binary_focal_loss(prob, target))
    ref = jax.block_until_ready(_reference(prob, target))
    assert jnp.allclose(loss, ref, rtol=1e-5, atol=1e-6), (loss, ref)

    # Secondary check: unaligned element count exercises the remainder path.
    shape2 = (3, 5, 7, 11)   # 1155 elements -> 1024 in-kernel + 131 tail
    prob2 = jax.nn.sigmoid(jax.random.normal(k_p2, shape2, dtype=jnp.float32))
    target2 = jax.random.bernoulli(k_t2, p=0.3, shape=shape2).astype(jnp.float32)

    loss2 = jax.block_until_ready(binary_focal_loss(prob2, target2))
    ref2 = jax.block_until_ready(_reference(prob2, target2))
    assert jnp.allclose(loss2, ref2, rtol=1e-5, atol=1e-6), (loss2, ref2)

    print("KERNEL_OK")
</pallas_src>

<mosaic_0001>
module attributes {stable_mosaic.version = 11 : i64} {
  func.func @_focal_kernel(%arg0: i32, %arg1: i32, %arg2: memref<16x128xf32, #tpu.memory_space<vmem>>, %arg3: memref<16x128xf32, #tpu.memory_space<vmem>>, %arg4: memref<8x128xf32, #tpu.memory_space<vmem>>) attributes {dimension_semantics = [#tpu.dimension_semantics<parallel>, #tpu.dimension_semantics<arbitrary>], iteration_bounds = array<i64: 1, 1>, scalar_prefetch = 0 : i64, scratch_operands = 0 : i64, tpu.core_type = #tpu.core_type<tc>, window_params = [{transform_indices = @transform_0, window_bounds = array<i64: 16, 128>}, {transform_indices = @transform_1, window_bounds = array<i64: 16, 128>}, {transform_indices = @transform_2, window_bounds = array<i64: 8, 128>}]} {
    %c0_i32 = arith.constant 0 : i32
    %0 = arith.cmpi eq, %arg1, %c0_i32 : i32
    %1 = arith.extui %0 : i1 to i32
    %c0_i32_0 = arith.constant 0 : i32
    %2 = arith.cmpi ne, %1, %c0_i32_0 : i32
    scf.if %2 {
      %cst_13 = arith.constant 0.000000e+00 : f32
      %25 = vector.broadcast %cst_13 : f32 to vector<8x128xf32>
      %c0_14 = arith.constant 0 : index
      %c0_15 = arith.constant 0 : index
      %26 = vector.load %arg4[%c0_14, %c0_15] : memref<8x128xf32, #tpu.memory_space<vmem>>, vector<8x128xf32>
      tpu.vector_store %arg4[%c0_14, %c0_15], %25 {strides = array<i32>} : memref<8x128xf32, #tpu.memory_space<vmem>>, vector<8x128xf32>,
    } else {
    }
    %c0 = arith.constant 0 : index
    %c0_1 = arith.constant 0 : index
    %3 = vector.load %arg2[%c0, %c0_1] : memref<16x128xf32, #tpu.memory_space<vmem>>, vector<16x128xf32>
    %c0_2 = arith.constant 0 : index
    %c0_3 = arith.constant 0 : index
    %4 = vector.load %arg3[%c0_2, %c0_3] : memref<16x128xf32, #tpu.memory_space<vmem>>, vector<16x128xf32>
    %cst = arith.constant 1.000000e+00 : f32
    %5 = vector.broadcast %cst : f32 to vector<16x128xf32>
    %6 = arith.cmpf oeq, %4, %5 : vector<16x128xf32>
    %cst_4 = arith.constant 1.000000e+00 : f32
    %7 = vector.broadcast %cst_4 : f32 to vector<16x128xf32>
    %8 = arith.subf %7, %3 : vector<16x128xf32>
    %9 = arith.select %6, %3, %8 : vector<16x128xi1>, vector<16x128xf32>
    %10 = arith.select %6, %8, %3 : vector<16x128xi1>, vector<16x128xf32>
    %cst_5 = arith.constant -3.000000e+00 : f32
    %cst_6 = arith.constant -1.000000e+00 : f32
    %11 = vector.broadcast %cst_5 : f32 to vector<16x128xf32>
    %12 = vector.broadcast %cst_6 : f32 to vector<16x128xf32>
    %13 = arith.select %6, %11, %12 : vector<16x128xi1>, vector<16x128xf32>
    %cst_7 = arith.constant 9.99999971E-10 : f32
    %14 = vector.broadcast %cst_7 : f32 to vector<16x128xf32>
    %15 = arith.addf %9, %14 : vector<16x128xf32>
    %16 = math.log %15 : vector<16x128xf32>
    %17 = arith.mulf %10, %10 : vector<16x128xf32>
    %18 = arith.mulf %13, %17 : vector<16x128xf32>
    %19 = arith.mulf %18, %16 : vector<16x128xf32>
    %c0_8 = arith.constant 0 : index
    %c0_9 = arith.constant 0 : index
    %20 = vector.load %arg4[%c0_8, %c0_9] : memref<8x128xf32, #tpu.memory_space<vmem>>, vector<8x128xf32>
    %21 = vector.shape_cast %19 : vector<16x128xf32> to vector<2x8x128xf32>
    %cst_10 = arith.constant dense<0.000000e+00> : vector<8x128xf32>
    %22 = vector.multi_reduction <add>, %21, %cst_10 [0] : vector<2x8x128xf32> to vector<8x128xf32>
    %23 = arith.addf %20, %22 : vector<8x128xf32>
    %c0_11 = arith.constant 0 : index
    %c0_12 = arith.constant 0 : index
    %24 = vector.load %arg4[%c0_11, %c0_12] : memref<8x128xf32, #tpu.memory_space<vmem>>, vector<8x128xf32>
    tpu.vector_store %arg4[%c0_11, %c0_12], %23 {strides = array<i32>} : memref<8x128xf32, #tpu.memory_space<vmem>>, vector<8x128xf32>,
    return
  }
  func.func @transform_0(%arg0: i32, %arg1: i32) -> (i32, i32) {
    %c1_i32 = arith.constant 1 : i32
    %0 = arith.muli %arg0, %c1_i32 : i32
    %1 = arith.addi %0, %arg1 : i32
    %c0_i32 = arith.constant 0 : i32
    %c0_i32_0 = arith.constant 0 : i32
    return %1, %c0_i32 : i32, i32
  }
  func.func @transform_1(%arg0: i32, %arg1: i32) -> (i32, i32) {
    %c1_i32 = arith.constant 1 : i32
    %0 = arith.muli %arg0, %c1_i32 : i32
    %1 = arith.addi %0, %arg1 : i32
    %c0_i32 = arith.constant 0 : i32
    %c0_i32_0 = arith.constant 0 : i32
    return %1, %c0_i32 : i32, i32
  }
  func.func @transform_2(%arg0: i32, %arg1: i32) -> (i32, i32) {
    %c0_i32 = arith.constant 0 : i32
    %c0_i32_0 = arith.constant 0 : i32
    return %arg0, %c0_i32 : i32, i32
  }
}

</mosaic_0001>

<llo_original>
// kernel: tpu_custom_call.1
$region0: #{tpu_custom_call.1}
  #allocation0 [shape = 'u32[]', space=smem, size = 0x4, offset = 0x4, fixed_abs, tag = 'smem constant byte address 0x4 - core index']
  #allocation1 [shape = 'u32[72,128]{1,0:T(1,128)}', space=vmem, size = 0x9000, scoped, tag = 'internal scratch']
  %s0 = inlined_call_operand.hbm [shape: f32[16,128], index: 0, kind: input, shape index: {}]
  %s1 = inlined_call_operand.hbm [shape: f32[16,128], index: 1, kind: input, shape index: {}]
  %s2 = inlined_call_operand.hbm [shape: f32[8,128], index: 2, kind: output, shape index: {}]
  %s3 = sld [smem:[#allocation0]]
  $region30: #{tpu_custom_call.1} parent=0
    _
  %s5 = ssub.s32 1, %s3
  %s6 = scalar_select 0, %s5, %s3
  $region1: #{tpu_custom_call.1} parent=0
    #allocation2 [shape = 'u8[8192]{0}', space=vmem, size = 0x2000, scoped, tag = 'input window, operand 0, single buffered']
    #allocation3 [shape = 's32[1]{0}', space=sflag, size = 0x4, scoped, tag = 'scoped memory for tpu_custom_call.1']
    #allocation4 [shape = 's32[1]{0}', space=sflag, size = 0x4, scoped, tag = 'scoped memory for tpu_custom_call.1']
    #allocation5 [shape = 'u8[8192]{0}', space=vmem, size = 0x2000, scoped, tag = 'input window, operand 1, single buffered']
    #allocation6 [shape = 's32[1]{0}', space=sflag, size = 0x4, scoped, tag = 'scoped memory for tpu_custom_call.1']
    #allocation7 [shape = 'u8[4096]{0}', space=vmem, size = 0x1000, scoped, tag = 'output window, operand 0, single buffered']
    %7 = vsyncpa [#allocation3], 0
    %8 = vsyncpa [#allocation6], 0
    %9 = vsyncpa [#allocation4], 0
    // Predicated region
    $region2: #{tpu_custom_call.1} parent=1 // pred_check
      _
    $region3: #{tpu_custom_call.1} parent=1 // pred_check_branch
      %11 = sbr.rel (0) target = $region5
    $region4: #{tpu_custom_call.1} parent=1 // pred_region
      %s12 = sadd.s32 0, 0
      %s13 = smul.u32 2, %s12
      %15 = vsyncadd [#allocation3], 0
      %s16 = smul.addr %s13, 8
      %s17 = scalar_lea.hbm %s0, %s16
      %s18 = sshll.u32 %s17, 4
      %s19 = int_to_ptr.hbm [resolvable:$true] %s18
      %s20 = sshll.u32 [#allocation2], 4
      %s21 = int_to_ptr.vmem [resolvable:$true] %s20
      %26 = dma.hbm_to_vmem [thread:$0]  %s19, 256, %s21, [#allocation3], 128, 128, 8
    $region5: #{tpu_custom_call.1} parent=1 // pred_fallthru
      _
    // Predicated region
    $region6: #{tpu_custom_call.1} parent=1 // pred_check
      _
    $region7: #{tpu_custom_call.1} parent=1 // pred_check_branch
      %28 = sbr.rel (0) target = $region9
    $region8: #{tpu_custom_call.1} parent=1 // pred_region
      %s29 = sadd.s32 0, 0
      %s30 = smul.u32 2, %s29
      %32 = vsyncadd [#allocation6], 0
      %s33 = smul.addr %s30, 8
      %s34 = scalar_lea.hbm %s1, %s33
      %s35 = sshll.u32 %s34, 4
      %s36 = int_to_ptr.hbm [resolvable:$true] %s35
      %s37 = sshll.u32 [#allocation5], 4
      %s38 = int_to_ptr.vmem [resolvable:$true] %s37
      %43 = dma.hbm_to_vmem [thread:$0]  %s36, 256, %s38, [#allocation6], 128, 128, 8
    $region9: #{tpu_custom_call.1} parent=1 // pred_fallthru
      _
    // Predicated region
    $region10: #{tpu_custom_call.1} parent=1 // pred_check
      _
    $region11: #{tpu_custom_call.1} parent=1 // pred_check_branch
      %45 = sbr.rel (0) target = $region13
    $region12: #{tpu_custom_call.1} parent=1 // pred_region
      %47 = dma.done [#allocation3], 256
    $region13: #{tpu_custom_call.1} parent=1 // pred_fallthru
      _
    // Predicated region
    $region14: #{tpu_custom_call.1} parent=1 // pred_check
      _
    $region15: #{tpu_custom_call.1} parent=1 // pred_check_branch
      %49 = sbr.rel (0) target = $region17
    $region16: #{tpu_custom_call.1} parent=1 // pred_region
      %51 = dma.done [#allocation6], 256
    $region17: #{tpu_custom_call.1} parent=1 // pred_fallthru
      _
    %s52 = sadd.s32 0, 0
    %s53 = smul.u32 2, %s52
    %s54 = sadd.s32 0, 0
    %s55 = smul.u32 2, %s54
    %p56 = scmp.eq.s32.totalorder 0, 0
    // Predicated region
    $region18: #{tpu_custom_call.1} parent=1 // pred_check
      %p57 = pneg %p56
    $region19: #{tpu_custom_call.1} parent=1 // pred_check_branch
      %59 = sbr.rel (%p57) target = $region21
    $region20: #{tpu_custom_call.1} parent=1 // pred_region
      %60 = vst [vmem:[#allocation7] sm:$0xff] 0.0
    $region21: #{tpu_custom_call.1} parent=1 // pred_fallthru
      _
    %v61 = vld [vmem:[#allocation2] sm:$0xff]
    %v62 = vld [vmem:[#allocation2 + $0x8] sm:$0xff]
    %v63 = vld [vmem:[#allocation5] sm:$0xff]
    %v64 = vld [vmem:[#allocation5 + $0x8] sm:$0xff]
    %vm65 = vcmp.eq.f32.partialorder %v63, 1.0
    %vm66 = vcmp.eq.f32.partialorder %v64, 1.0
    %v67 = vsub.f32 1.0, %v61
    %v68 = vsub.f32 1.0, %v62
    %v69 = vsel %vm65, %v61, %v67
    %v70 = vsel %vm66, %v62, %v68
    %v71 = vsel %vm65, %v67, %v61
    %v72 = vsel %vm66, %v68, %v62
    %v73 = vsel %vm65, -3.0, -1.0
    %v74 = vsel %vm66, -3.0, -1.0
    %v75 = vadd.f32 %v69, 1e-09
    %v76 = vadd.f32 %v70, 1e-09
    %v77 = vlog2.pop %v75
    %v78 = vmul.f32 %v77, 0.6931472
    %v79 = vlog2.pop %v76
    %v80 = vmul.f32 %v79, 0.6931472
    %v81 = vmul.f32 %v71, %v71
    %v82 = vmul.f32 %v72, %v72
    %v83 = vmul.f32 %v73, %v81
    %v84 = vmul.f32 %v74, %v82
    %v85 = vmul.f32 %v83, %v78
    %v86 = vmul.f32 %v84, %v80
    %v87 = vld [vmem:[#allocation7] sm:$0xff]
    %v88 = vadd.f32 %v85, %v86
    %v89 = vadd.f32 %v87, %v88
    %90 = vst [vmem:[#allocation7] sm:$0xff] %v89
    // Predicated region
    $region22: #{tpu_custom_call.1} parent=1 // pred_check
      _
    $region23: #{tpu_custom_call.1} parent=1 // pred_check_branch
      %92 = sbr.rel (0) target = $region25
    $region24: #{tpu_custom_call.1} parent=1 // pred_region
      %94 = vsyncadd [#allocation4], 0
      %s96 = sshll.u32 [#allocation7], 4
      %s97 = int_to_ptr.vmem [resolvable:$true] %s96
      %s98 = sshll.u32 %s2, 4
      %s99 = int_to_ptr.hbm [resolvable:$true] %s98
      %101 = dma.vmem_to_hbm [thread:$0]  %s97, 128, %s99, [#allocation4]
    $region25: #{tpu_custom_call.1} parent=1 // pred_fallthru
      _
    // Predicated region
    $region26: #{tpu_custom_call.1} parent=1 // pred_check
      _
    $region27: #{tpu_custom_call.1} parent=1 // pred_check_branch
      %103 = sbr.rel (0) target = $region29
    $region28: #{tpu_custom_call.1} parent=1 // pred_region
      %105 = dma.done [#allocation4], 128
    $region29: #{tpu_custom_call.1} parent=1 // pred_fallthru
      _
    %106 = vsyncpa [#allocation3], 1
    %107 = vsyncpa [#allocation6], 1
    %108 = vsyncpa [#allocation4], 1

</llo_original>
